<compile_context>
chip_gen: v6e
topology: v6e:2x2x1
jax: 0.10.0
libtpu: 0.0.40
codegen_flags: <defaults>
</compile_context>

<pallas_src>
import functools

import jax
import jax.numpy as jnp
from jax.experimental import pallas as pl
from jax.experimental.pallas import tpu as pltpu

LEAKY_SLOPE = 0.01      # nn.LeakyReLU() default negative_slope
BN_EPS = 1e-5           # nn.BatchNorm1d default eps
LANE = 128
_TILE_B_MAX = 2048      # ~1-2 MB/step working set; fits v5e/v6e/v7x easily


def _leaky_relu(x):
    return jnp.where(x > 0, x, LEAKY_SLOPE * x)


def _round_up(n, m):
    return ((n + m - 1) // m) * m


def network_kernel(x_ref, w1_ref, b1_ref, w2_ref, b2_ref, w3_ref, b3_ref,
                   out_ref):
    # x: (tile_b, S) bf16; weights bf16; biases f32; accumulate in f32.
    x = x_ref[...]

    # Linear(mlp_in -> fc1) + LeakyReLU  (BN1 already folded into W2/b2)
    h = jnp.dot(x, w1_ref[...], preferred_element_type=jnp.float32)
    h = _leaky_relu(h + b1_ref[...])

    # Linear(fc1 -> fc2) + LeakyReLU     (BN2 already folded into W3/b3)
    h = jnp.dot(h.astype(jnp.bfloat16), w2_ref[...],
                preferred_element_type=jnp.float32)
    h = _leaky_relu(h + b2_ref[...])

    # Linear(fc2 -> action_size): true-width output (masked 4-lane store)
    out = jnp.dot(h.astype(jnp.bfloat16), w3_ref[...],
                  preferred_element_type=jnp.float32) + b3_ref[...]
    out_ref[...] = out.astype(out_ref.dtype)


def pack_params(p):
    """Fold eval-mode BN into the following Linear layers, pad only the hidden
    feature dims (fc1/fc2) to 128, and cast weights to bf16."""
    state_size, fc1 = p["w1"].shape
    fc2 = p["w2"].shape[1]
    action_size = p["w3"].shape[1]

    f1_pad = _round_up(fc1, LANE)
    f2_pad = _round_up(fc2, LANE)

    # Eval-mode BN -> per-feature scale/shift, then fold into next Linear.
    s1 = p["g1"] / jnp.sqrt(p["rv1"] + BN_EPS)
    t1 = p["beta1"] - p["rm1"] * s1
    s2 = p["g2"] / jnp.sqrt(p["rv2"] + BN_EPS)
    t2 = p["beta2"] - p["rm2"] * s2

    w2f = s1[:, None] * p["w2"]
    b2f = p["b2"] + t1 @ p["w2"]
    w3f = s2[:, None] * p["w3"]
    b3f = p["b3"] + t2 @ p["w3"]

    def pad2(w, r, c, dtype):
        out = jnp.zeros((r, c), dtype)
        return out.at[: w.shape[0], : w.shape[1]].set(w.astype(dtype))

    def pad_row(v, c):
        out = jnp.zeros((1, c), jnp.float32)
        return out.at[0, : v.shape[0]].set(v.astype(jnp.float32))

    return (
        pad2(p["w1"], state_size, f1_pad, jnp.bfloat16),      # (S, f1_pad)
        pad_row(p["b1"], f1_pad),
        pad2(w2f, f1_pad, f2_pad, jnp.bfloat16),               # (f1_pad, f2_pad)
        pad_row(b2f, f2_pad),
        pad2(w3f, f2_pad, action_size, jnp.bfloat16),          # (f2_pad, A)
        pad_row(b3f, action_size),
    )


@functools.partial(jax.jit, static_argnames=("action_size",))
def network_forward(state, packed, *, action_size):
    """Returns output of shape [B, action_size], matching Network.forward."""
    if state.ndim == 1:
        state = state[None]
    B, S = state.shape

    (w1, b1, w2, b2, w3, b3) = packed

    # bf16 activations halve input HBM traffic; accumulation stays f32.
    x = state.astype(jnp.bfloat16)

    # Batch tiling: ragged edge blocks are masked by Pallas, no batch padding.
    tile_b = min(_TILE_B_MAX, _round_up(B, 8))
    grid = (pl.cdiv(B, tile_b),)

    def resident(shape):
        # Constant block index -> stays VMEM-resident across grid steps.
        return pl.BlockSpec(shape, lambda i: (0, 0))

    out = pl.pallas_call(
        network_kernel,
        out_shape=jax.ShapeDtypeStruct((B, action_size), jnp.float32),
        grid_spec=pltpu.PrefetchScalarGridSpec(
            num_scalar_prefetch=0,
            grid=grid,
            in_specs=[
                pl.BlockSpec((tile_b, S), lambda i: (i, 0)),   # activations
                resident(w1.shape), resident(b1.shape),        # W1, b1
                resident(w2.shape), resident(b2.shape),        # W2', b2'
                resident(w3.shape), resident(b3.shape),        # W3', b3'
            ],
            out_specs=pl.BlockSpec((tile_b, action_size), lambda i: (i, 0)),
        ),
        compiler_params=pltpu.CompilerParams(
            dimension_semantics=("parallel",),
            vmem_limit_bytes=32 * 1024 * 1024,
        ),
    )(x, w1, b1, w2, b2, w3, b3)

    return out


def make_params(key, state_size, fc1_units, fc2_units, action_size):
    """PyTorch-style init: Linear weights/biases ~ U(-1/sqrt(fan_in), ...),
    plus non-trivial eval-mode BatchNorm running stats / affine params."""
    ks = jax.random.split(key, 12)

    def lin(k, fan_in, fan_out):
        kw, kb = jax.random.split(k)
        bound = 1.0 / jnp.sqrt(jnp.float32(fan_in))
        w = jax.random.uniform(kw, (fan_in, fan_out), jnp.float32, -bound, bound)
        b = jax.random.uniform(kb, (fan_out,), jnp.float32, -bound, bound)
        return w, b

    w1, b1 = lin(ks[0], state_size, fc1_units)
    w2, b2 = lin(ks[1], fc1_units, fc2_units)
    w3, b3 = lin(ks[2], fc2_units, action_size)

    g1 = 1.0 + 0.1 * jax.random.normal(ks[3], (fc1_units,), jnp.float32)
    beta1 = 0.1 * jax.random.normal(ks[4], (fc1_units,), jnp.float32)
    rm1 = 0.1 * jax.random.normal(ks[5], (fc1_units,), jnp.float32)
    rv1 = jax.random.uniform(ks[6], (fc1_units,), jnp.float32, 0.5, 1.5)

    g2 = 1.0 + 0.1 * jax.random.normal(ks[7], (fc2_units,), jnp.float32)
    beta2 = 0.1 * jax.random.normal(ks[8], (fc2_units,), jnp.float32)
    rm2 = 0.1 * jax.random.normal(ks[9], (fc2_units,), jnp.float32)
    rv2 = jax.random.uniform(ks[10], (fc2_units,), jnp.float32, 0.5, 1.5)

    return dict(w1=w1, b1=b1, g1=g1, beta1=beta1, rm1=rm1, rv1=rv1,
                w2=w2, b2=b2, g2=g2, beta2=beta2, rm2=rm2, rv2=rv2,
                w3=w3, b3=b3)


def reference_forward(state, p):
    """Pure-JAX f32 reference matching the PyTorch module (eval mode)."""
    if state.ndim == 1:
        state = state[None]
    h = _leaky_relu(state @ p["w1"] + p["b1"])
    h = (h - p["rm1"]) / jnp.sqrt(p["rv1"] + BN_EPS) * p["g1"] + p["beta1"]
    h = _leaky_relu(h @ p["w2"] + p["b2"])
    h = (h - p["rm2"]) / jnp.sqrt(p["rv2"] + BN_EPS) * p["g2"] + p["beta2"]
    return h @ p["w3"] + p["b3"]


if __name__ == "__main__":
    # Small shapes consistent with the module defaults
    # (fc1_units=20, fc2_units=fc3_units=100).
    batch = 8
    state_size = 16
    fc1_units = 20
    fc2_units = 100
    action_size = 4

    key = jax.random.PRNGKey(0)
    k_state, k_params = jax.random.split(key)

    state = jax.random.normal(k_state, (batch, state_size), jnp.float32)
    params = make_params(k_params, state_size, fc1_units, fc2_units, action_size)
    packed = pack_params(params)

    out = network_forward(state, packed, action_size=action_size)
    jax.block_until_ready(out)

    ref = reference_forward(state, params)
    assert out.shape == (batch, action_size)
    # bf16 weights/activations with f32 accumulation -> relaxed tolerance vs
    # the pure-f32 reference.
    max_err = float(jnp.max(jnp.abs(out - ref)))
    assert max_err < 5e-2, max_err

    print("KERNEL_OK")
</pallas_src>

<mosaic_0001>
module attributes {stable_mosaic.version = 11 : i64} {
  func.func @network_kernel(%arg0: i32, %arg1: memref<8x16xbf16, #tpu.memory_space<vmem>>, %arg2: memref<16x128xbf16, #tpu.memory_space<vmem>>, %arg3: memref<1x128xf32, #tpu.memory_space<vmem>>, %arg4: memref<128x128xbf16, #tpu.memory_space<vmem>>, %arg5: memref<1x128xf32, #tpu.memory_space<vmem>>, %arg6: memref<128x4xbf16, #tpu.memory_space<vmem>>, %arg7: memref<1x4xf32, #tpu.memory_space<vmem>>, %arg8: memref<8x4xf32, #tpu.memory_space<vmem>>) attributes {dimension_semantics = [#tpu.dimension_semantics<parallel>], iteration_bounds = array<i64: 1>, scalar_prefetch = 0 : i64, scratch_operands = 0 : i64, tpu.core_type = #tpu.core_type<tc>, window_params = [{transform_indices = @transform_0, window_bounds = array<i64: 8, 16>}, {pipeline_mode = #tpu.pipeline_mode<synchronous>, transform_indices = @transform_1, window_bounds = array<i64: 16, 128>}, {pipeline_mode = #tpu.pipeline_mode<synchronous>, transform_indices = @transform_2, window_bounds = array<i64: 1, 128>}, {pipeline_mode = #tpu.pipeline_mode<synchronous>, transform_indices = @transform_3, window_bounds = array<i64: 128, 128>}, {pipeline_mode = #tpu.pipeline_mode<synchronous>, transform_indices = @transform_4, window_bounds = array<i64: 1, 128>}, {pipeline_mode = #tpu.pipeline_mode<synchronous>, transform_indices = @transform_5, window_bounds = array<i64: 128, 4>}, {pipeline_mode = #tpu.pipeline_mode<synchronous>, transform_indices = @transform_6, window_bounds = array<i64: 1, 4>}, {transform_indices = @transform_7, window_bounds = array<i64: 8, 4>}]} {
    %c0 = arith.constant 0 : index
    %c0_0 = arith.constant 0 : index
    %0 = vector.load %arg1[%c0, %c0_0] : memref<8x16xbf16, #tpu.memory_space<vmem>>, vector<8x16xbf16>
    %c0_1 = arith.constant 0 : index
    %c0_2 = arith.constant 0 : index
    %1 = vector.load %arg2[%c0_1, %c0_2] : memref<16x128xbf16, #tpu.memory_space<vmem>>, vector<16x128xbf16>
    %cst = arith.constant dense<0.000000e+00> : vector<8x128xf32>
    %2 = tpu.matmul %0, %1, %cst {dimension_numbers = #tpu.dot_dimension_numbers<[1], [0], [0], [1], [0, 0, 1, 1], [], []>} : vector<8x16xbf16>, vector<16x128xbf16>, vector<8x128xf32> -> vector<8x128xf32>
    %c0_3 = arith.constant 0 : index
    %c0_4 = arith.constant 0 : index
    %3 = vector.load %arg3[%c0_3, %c0_4] : memref<1x128xf32, #tpu.memory_space<vmem>>, vector<1x128xf32>
    %4 = vector.broadcast %3 : vector<1x128xf32> to vector<8x128xf32>
    %5 = arith.addf %2, %4 : vector<8x128xf32>
    %cst_5 = arith.constant 0.000000e+00 : f32
    %6 = vector.broadcast %cst_5 : f32 to vector<8x128xf32>
    %7 = arith.cmpf ogt, %5, %6 : vector<8x128xf32>
    %cst_6 = arith.constant 0.00999999977 : f32
    %8 = vector.broadcast %cst_6 : f32 to vector<8x128xf32>
    %9 = arith.mulf %8, %5 : vector<8x128xf32>
    %10 = arith.select %7, %5, %9 : vector<8x128xi1>, vector<8x128xf32>
    %11 = arith.truncf %10 : vector<8x128xf32> to vector<8x128xbf16>
    %c0_7 = arith.constant 0 : index
    %c0_8 = arith.constant 0 : index
    %12 = vector.load %arg4[%c0_7, %c0_8] : memref<128x128xbf16, #tpu.memory_space<vmem>>, vector<128x128xbf16>
    %cst_9 = arith.constant dense<0.000000e+00> : vector<8x128xf32>
    %13 = tpu.matmul %11, %12, %cst_9 {dimension_numbers = #tpu.dot_dimension_numbers<[1], [0], [0], [1], [0, 0, 1, 1], [], []>} : vector<8x128xbf16>, vector<128x128xbf16>, vector<8x128xf32> -> vector<8x128xf32>
    %c0_10 = arith.constant 0 : index
    %c0_11 = arith.constant 0 : index
    %14 = vector.load %arg5[%c0_10, %c0_11] : memref<1x128xf32, #tpu.memory_space<vmem>>, vector<1x128xf32>
    %15 = vector.broadcast %14 : vector<1x128xf32> to vector<8x128xf32>
    %16 = arith.addf %13, %15 : vector<8x128xf32>
    %cst_12 = arith.constant 0.000000e+00 : f32
    %17 = vector.broadcast %cst_12 : f32 to vector<8x128xf32>
    %18 = arith.cmpf ogt, %16, %17 : vector<8x128xf32>
    %cst_13 = arith.constant 0.00999999977 : f32
    %19 = vector.broadcast %cst_13 : f32 to vector<8x128xf32>
    %20 = arith.mulf %19, %16 : vector<8x128xf32>
    %21 = arith.select %18, %16, %20 : vector<8x128xi1>, vector<8x128xf32>
    %22 = arith.truncf %21 : vector<8x128xf32> to vector<8x128xbf16>
    %c0_14 = arith.constant 0 : index
    %c0_15 = arith.constant 0 : index
    %23 = vector.load %arg6[%c0_14, %c0_15] : memref<128x4xbf16, #tpu.memory_space<vmem>>, vector<128x4xbf16>
    %cst_16 = arith.constant dense<0.000000e+00> : vector<8x4xf32>
    %24 = tpu.matmul %22, %23, %cst_16 {dimension_numbers = #tpu.dot_dimension_numbers<[1], [0], [0], [1], [0, 0, 1, 1], [], []>} : vector<8x128xbf16>, vector<128x4xbf16>, vector<8x4xf32> -> vector<8x4xf32>
    %c0_17 = arith.constant 0 : index
    %c0_18 = arith.constant 0 : index
    %25 = vector.load %arg7[%c0_17, %c0_18] : memref<1x4xf32, #tpu.memory_space<vmem>>, vector<1x4xf32>
    %26 = vector.broadcast %25 : vector<1x4xf32> to vector<8x4xf32>
    %27 = arith.addf %24, %26 : vector<8x4xf32>
    %c0_19 = arith.constant 0 : index
    %c0_20 = arith.constant 0 : index
    %28 = vector.load %arg8[%c0_19, %c0_20] : memref<8x4xf32, #tpu.memory_space<vmem>>, vector<8x4xf32>
    tpu.vector_store %arg8[%c0_19, %c0_20], %27 {strides = array<i32>} : memref<8x4xf32, #tpu.memory_space<vmem>>, vector<8x4xf32>,
    return
  }
  func.func @transform_0(%arg0: i32) -> (i32, i32) {
    %c0_i32 = arith.constant 0 : i32
    %c0_i32_0 = arith.constant 0 : i32
    return %arg0, %c0_i32 : i32, i32
  }
  func.func @transform_1(%arg0: i32) -> (i32, i32) {
    %c0_i32 = arith.constant 0 : i32
    %c0_i32_0 = arith.constant 0 : i32
    %c0_i32_1 = arith.constant 0 : i32
    return %c0_i32, %c0_i32_0 : i32, i32
  }
  func.func @transform_2(%arg0: i32) -> (i32, i32) {
    %c0_i32 = arith.constant 0 : i32
    %c0_i32_0 = arith.constant 0 : i32
    %c0_i32_1 = arith.constant 0 : i32
    return %c0_i32, %c0_i32_0 : i32, i32
  }
  func.func @transform_3(%arg0: i32) -> (i32, i32) {
    %c0_i32 = arith.constant 0 : i32
    %c0_i32_0 = arith.constant 0 : i32
    %c0_i32_1 = arith.constant 0 : i32
    return %c0_i32, %c0_i32_0 : i32, i32
  }
  func.func @transform_4(%arg0: i32) -> (i32, i32) {
    %c0_i32 = arith.constant 0 : i32
    %c0_i32_0 = arith.constant 0 : i32
    %c0_i32_1 = arith.constant 0 : i32
    return %c0_i32, %c0_i32_0 : i32, i32
  }
  func.func @transform_5(%arg0: i32) -> (i32, i32) {
    %c0_i32 = arith.constant 0 : i32
    %c0_i32_0 = arith.constant 0 : i32
    %c0_i32_1 = arith.constant 0 : i32
    return %c0_i32, %c0_i32_0 : i32, i32
  }
  func.func @transform_6(%arg0: i32) -> (i32, i32) {
    %c0_i32 = arith.constant 0 : i32
    %c0_i32_0 = arith.constant 0 : i32
    %c0_i32_1 = arith.constant 0 : i32
    return %c0_i32, %c0_i32_0 : i32, i32
  }
  func.func @transform_7(%arg0: i32) -> (i32, i32) {
    %c0_i32 = arith.constant 0 : i32
    %c0_i32_0 = arith.constant 0 : i32
    return %arg0, %c0_i32 : i32, i32
  }
}

</mosaic_0001>

<llo_original>
// kernel: network_forward.1
$region0: #{network_forward.1}
  #allocation0 [shape = 'u32[]', space=smem, size = 0x4, offset = 0x4, fixed_abs, tag = 'smem constant byte address 0x4 - core index']
  #allocation1 [shape = 'u32[144,128]{1,0:T(1,128)}', space=vmem, size = 0x12000, scoped, tag = 'internal scratch']
  %s0 = inlined_call_operand.vmem [shape: bf16[8,16], index: 0, kind: input, shape index: {}]
  %s1 = inlined_call_operand.vmem [shape: bf16[16,128], index: 1, kind: input, shape index: {}]
  %s2 = inlined_call_operand.vmem [shape: f32[1,128], index: 2, kind: input, shape index: {}]
  %s3 = inlined_call_operand.vmem [shape: bf16[128,128], index: 3, kind: input, shape index: {}]
  %s4 = inlined_call_operand.vmem [shape: f32[1,128], index: 4, kind: input, shape index: {}]
  %s5 = inlined_call_operand.vmem [shape: bf16[128,4], index: 5, kind: input, shape index: {}]
  %s6 = inlined_call_operand.vmem [shape: f32[1,4], index: 6, kind: input, shape index: {}]
  %s7 = inlined_call_operand.vmem [shape: f32[8,4], index: 7, kind: output, shape index: {}]
  %s8 = sld [smem:[#allocation0]]
  $region38: #{network_forward.1} parent=0
    _
  %s10 = ssub.s32 1, %s8
  %s11 = scalar_select 0, %s10, %s8
  // Predicated region
  $region2: #{network_forward.1} parent=0 // pred_check
    _
  $region3: #{network_forward.1} parent=0 // pred_check_branch
    %13 = sbr.rel (0) target = $region5
  $region4: #{network_forward.1} parent=0 // pred_region
    _
  $region5: #{network_forward.1} parent=0 // pred_fallthru
    _
  // Predicated region
  $region6: #{network_forward.1} parent=0 // pred_check
    _
  $region7: #{network_forward.1} parent=0 // pred_check_branch
    %15 = sbr.rel (0) target = $region9
  $region8: #{network_forward.1} parent=0 // pred_region
    _
  $region9: #{network_forward.1} parent=0 // pred_fallthru
    _
  // Predicated region
  $region10: #{network_forward.1} parent=0 // pred_check
    _
  $region11: #{network_forward.1} parent=0 // pred_check_branch
    %17 = sbr.rel (0) target = $region13
  $region12: #{network_forward.1} parent=0 // pred_region
    _
  $region13: #{network_forward.1} parent=0 // pred_fallthru
    _
  // Predicated region
  $region14: #{network_forward.1} parent=0 // pred_check
    _
  $region15: #{network_forward.1} parent=0 // pred_check_branch
    %19 = sbr.rel (0) target = $region17
  $region16: #{network_forward.1} parent=0 // pred_region
    _
  $region17: #{network_forward.1} parent=0 // pred_fallthru
    _
  // Predicated region
  $region18: #{network_forward.1} parent=0 // pred_check
    _
  $region19: #{network_forward.1} parent=0 // pred_check_branch
    %21 = sbr.rel (0) target = $region21
  $region20: #{network_forward.1} parent=0 // pred_region
    _
  $region21: #{network_forward.1} parent=0 // pred_fallthru
    _
  // Predicated region
  $region22: #{network_forward.1} parent=0 // pred_check
    _
  $region23: #{network_forward.1} parent=0 // pred_check_branch
    %23 = sbr.rel (0) target = $region25
  $region24: #{network_forward.1} parent=0 // pred_region
    _
  $region25: #{network_forward.1} parent=0 // pred_fallthru
    _
  // Predicated region
  $region26: #{network_forward.1} parent=0 // pred_check
    _
  $region27: #{network_forward.1} parent=0 // pred_check_branch
    %25 = sbr.rel (0) target = $region29
  $region28: #{network_forward.1} parent=0 // pred_region
    _
  $region29: #{network_forward.1} parent=0 // pred_fallthru
    _
  %v27 = vld [vmem:[%s0] sm:$0xf]
  %v28 = vld [vmem:[%s1] sm:$0xf]
  %v29 = vld [vmem:[%s1 + $0x4] sm:$0xf]
  %v30 = vld [vmem:[%s2] sm:$0x1]
  %v32 = vlaneseq
  %v33 = vshrl.u32 %v32, 7
  %v34 = vsub.s32 0, %v33
  %v35 = vrot.slane %v30, %v34
  %v39 = vunpack.c.l.b16 %v28
  %v40 = vunpack.c.l.b16 %v29
  %v41 = vpack.c.b16 %v40, %v39
  %vm43 = vcmask 130048
  %v45 = vsel %vm43, %v27, 0
  %47 = vmatprep.subr.bf16.mxu0 0
  %48 = vmatpush1.bf16.msra.mxu0 0
  %49 = vmatprep.subr.bf16.mxu0 0
  %50 = vmatpush1.bf16.msra.mxu0 0
  %51 = vmatprep.subr.bf16.mxu0 0
  %52 = vmatpush1.bf16.msra.mxu0 0
  %53 = vmatprep.subr.bf16.mxu0 0
  %54 = vmatpush1.bf16.msra.mxu0 0
  %55 = vmatprep.subr.bf16.mxu0 0
  %56 = vmatpush1.bf16.msra.mxu0 0
  %57 = vmatprep.subr.bf16.mxu0 0
  %58 = vmatpush1.bf16.msra.mxu0 0
  %59 = vmatprep.subr.bf16.mxu0 0
  %60 = vmatpush1.bf16.msra.mxu0 0
  %61 = vmatprep.subr.bf16.mxu0 0
  %62 = vmatpush1.bf16.msra.mxu0 %v41
  %63 = vmatprep.subr.bf16.mxu0 0
  %64 = vmatpush2.bf16.msra.mxu0 0
  %65 = vmatprep.subr.bf16.mxu0 0
  %66 = vmatpush2.bf16.msra.mxu0 0
  %67 = vmatprep.subr.bf16.mxu0 0
  %68 = vmatpush2.bf16.msra.mxu0 0
  %69 = vmatprep.subr.bf16.mxu0 0
  %70 = vmatpush2.bf16.msra.mxu0 0
  %71 = vmatprep.subr.bf16.mxu0 0
  %72 = vmatpush2.bf16.msra.mxu0 0
  %73 = vmatprep.subr.bf16.mxu0 0
  %74 = vmatpush2.bf16.msra.mxu0 0
  %75 = vmatprep.subr.bf16.mxu0 0
  %76 = vmatpush2.bf16.msra.mxu0 0
  %77 = vmatprep.subr.bf16.mxu0 0
  %78 = vmatpush2.bf16.msra.mxu0 0
  %79 = vmatprep.mubr.bf16.mxu0 0
  %80 = vmatmul.mubr.bf16.gmra.mxu0 %v45
  %v81 = vpop.f32.mrf.mxu0
  %v82 = vadd.f32 %v35, %v81
  %v83 = vpop.f32.mrf.mxu0
  %v84 = vpop.f32.mrf.mxu0
  %v85 = vpop.f32.mrf.mxu0
  %86 = vdwg.mxu0
  %vm87 = vcmp.gt.f32.partialorder %v82, 0.0
  %v88 = vmul.f32 %v82, 0.01
  %v89 = vsel %vm87, %v82, %v88
  %v90 = vpack.c.bf16 %v89, %v89
  %v91 = vld [vmem:[%s3] sm:$0xf]
  %v92 = vld [vmem:[%s3 + $0x4] sm:$0xf]
  %v93 = vld [vmem:[%s3 + $0x8] sm:$0xf]
  %v94 = vld [vmem:[%s3 + $0xc] sm:$0xf]
  %v95 = vld [vmem:[%s3 + $0x10] sm:$0xf]
  %v96 = vld [vmem:[%s3 + $0x14] sm:$0xf]
  %v97 = vld [vmem:[%s3 + $0x18] sm:$0xf]
  %v98 = vld [vmem:[%s3 + $0x1c] sm:$0xf]
  %v99 = vld [vmem:[%s3 + $0x20] sm:$0xf]
  %v100 = vld [vmem:[%s3 + $0x24] sm:$0xf]
  %v101 = vld [vmem:[%s3 + $0x28] sm:$0xf]
  %v102 = vld [vmem:[%s3 + $0x2c] sm:$0xf]
  %v103 = vld [vmem:[%s3 + $0x30] sm:$0xf]
  %v104 = vld [vmem:[%s3 + $0x34] sm:$0xf]
  %v105 = vld [vmem:[%s3 + $0x38] sm:$0xf]
  %v106 = vld [vmem:[%s3 + $0x3c] sm:$0xf]
  %v107 = vld [vmem:[%s4] sm:$0x1]
  %v109 = vlaneseq
  %v110 = vshrl.u32 %v109, 7
  %v111 = vsub.s32 0, %v110
  %v112 = vrot.slane %v107, %v111
  %v130 = vunpack.c.l.b16 %v91
  %v131 = vunpack.c.l.b16 %v92
  %v132 = vunpack.c.l.b16 %v93
  %v133 = vunpack.c.l.b16 %v94
  %v134 = vunpack.c.l.b16 %v95
  %v135 = vunpack.c.l.b16 %v96
  %v136 = vunpack.c.l.b16 %v97
  %v137 = vunpack.c.l.b16 %v98
  %v138 = vunpack.c.l.b16 %v99
  %v139 = vunpack.c.l.b16 %v100
  %v140 = vunpack.c.l.b16 %v101
  %v141 = vunpack.c.l.b16 %v102
  %v142 = vunpack.c.l.b16 %v103
  %v143 = vunpack.c.l.b16 %v104
  %v144 = vunpack.c.l.b16 %v105
  %v145 = vunpack.c.l.b16 %v106
  %v146 = vpack.c.b16 %v131, %v130
  %v147 = vpack.c.b16 %v133, %v132
  %v148 = vpack.c.b16 %v135, %v134
  %v149 = vpack.c.b16 %v137, %v136
  %v150 = vpack.c.b16 %v139, %v138
  %v151 = vpack.c.b16 %v141, %v140
  %v152 = vpack.c.b16 %v143, %v142
  %v153 = vpack.c.b16 %v145, %v144
  %162 = vmatprep.subr.bf16.mxu0 0
  %163 = vmatpush1.bf16.msra.mxu0 %v153
  %164 = vmatprep.subr.bf16.mxu0 0
  %165 = vmatpush1.bf16.msra.mxu0 %v152
  %166 = vmatprep.subr.bf16.mxu0 0
  %167 = vmatpush1.bf16.msra.mxu0 %v151
  %168 = vmatprep.subr.bf16.mxu0 0
  %169 = vmatpush1.bf16.msra.mxu0 %v150
  %170 = vmatprep.subr.bf16.mxu0 0
  %171 = vmatpush1.bf16.msra.mxu0 %v149
  %172 = vmatprep.subr.bf16.mxu0 0
  %173 = vmatpush1.bf16.msra.mxu0 %v148
  %174 = vmatprep.subr.bf16.mxu0 0
  %175 = vmatpush1.bf16.msra.mxu0 %v147
  %176 = vmatprep.subr.bf16.mxu0 0
  %177 = vmatpush1.bf16.msra.mxu0 %v146
  %178 = vmatprep.subr.bf16.mxu0 0
  %179 = vmatpush2.bf16.msra.mxu0 0
  %180 = vmatprep.subr.bf16.mxu0 0
  %181 = vmatpush2.bf16.msra.mxu0 0
  %182 = vmatprep.subr.bf16.mxu0 0
  %183 = vmatpush2.bf16.msra.mxu0 0
  %184 = vmatprep.subr.bf16.mxu0 0
  %185 = vmatpush2.bf16.msra.mxu0 0
  %186 = vmatprep.subr.bf16.mxu0 0
  %187 = vmatpush2.bf16.msra.mxu0 0
  %188 = vmatprep.subr.bf16.mxu0 0
  %189 = vmatpush2.bf16.msra.mxu0 0
  %190 = vmatprep.subr.bf16.mxu0 0
  %191 = vmatpush2.bf16.msra.mxu0 0
  %192 = vmatprep.subr.bf16.mxu0 0
  %193 = vmatpush2.bf16.msra.mxu0 0
  %194 = vmatprep.mubr.bf16.mxu0 0
  %195 = vmatmul.mubr.bf16.gmra.mxu0 %v90
  %v196 = vpop.f32.mrf.mxu0
  %v197 = vadd.f32 %v112, %v196
  %v198 = vpop.f32.mrf.mxu0
  %v199 = vpop.f32.mrf.mxu0
  %v200 = vpop.f32.mrf.mxu0
  %201 = vdwg.mxu0
  %vm202 = vcmp.gt.f32.partialorder %v197, 0.0
  %v203 = vmul.f32 %v197, 0.01
  %v204 = vsel %vm202, %v197, %v203
  %v205 = vpack.c.bf16 %v204, %v204
  %v206 = vld [vmem:[%s5] sm:$0xf]
  %v207 = vld [vmem:[%s5 + $0x4] sm:$0xf]
  %v208 = vld [vmem:[%s5 + $0x8] sm:$0xf]
  %v209 = vld [vmem:[%s5 + $0xc] sm:$0xf]
  %v210 = vld [vmem:[%s5 + $0x10] sm:$0xf]
  %v211 = vld [vmem:[%s5 + $0x14] sm:$0xf]
  %v212 = vld [vmem:[%s5 + $0x18] sm:$0xf]
  %v213 = vld [vmem:[%s5 + $0x1c] sm:$0xf]
  %v214 = vld [vmem:[%s5 + $0x20] sm:$0xf]
  %v215 = vld [vmem:[%s5 + $0x24] sm:$0xf]
  %v216 = vld [vmem:[%s5 + $0x28] sm:$0xf]
  %v217 = vld [vmem:[%s5 + $0x2c] sm:$0xf]
  %v218 = vld [vmem:[%s5 + $0x30] sm:$0xf]
  %v219 = vld [vmem:[%s5 + $0x34] sm:$0xf]
  %v220 = vld [vmem:[%s5 + $0x38] sm:$0xf]
  %v221 = vld [vmem:[%s5 + $0x3c] sm:$0xf]
  %v222 = vld [vmem:[%s6] sm:$0x1]
  %v224 = vlaneseq
  %v225 = vshrl.u32 %v224, 7
  %v226 = vsub.s32 0, %v225
  %v227 = vrot.slane %v222, %v226
  %v245 = vunpack.c.l.b16 %v206
  %v246 = vunpack.c.l.b16 %v207
  %v247 = vunpack.c.l.b16 %v208
  %v248 = vunpack.c.l.b16 %v209
  %v249 = vunpack.c.l.b16 %v210
  %v250 = vunpack.c.l.b16 %v211
  %v251 = vunpack.c.l.b16 %v212
  %v252 = vunpack.c.l.b16 %v213
  %v253 = vunpack.c.l.b16 %v214
  %v254 = vunpack.c.l.b16 %v215
  %v255 = vunpack.c.l.b16 %v216
  %v256 = vunpack.c.l.b16 %v217
  %v257 = vunpack.c.l.b16 %v218
  %v258 = vunpack.c.l.b16 %v219
  %v259 = vunpack.c.l.b16 %v220
  %v260 = vunpack.c.l.b16 %v221
  %v261 = vpack.c.b16 %v246, %v245
  %v262 = vpack.c.b16 %v248, %v247
  %v263 = vpack.c.b16 %v250, %v249
  %v264 = vpack.c.b16 %v252, %v251
  %v265 = vpack.c.b16 %v254, %v253
  %v266 = vpack.c.b16 %v256, %v255
  %v267 = vpack.c.b16 %v258, %v257
  %v268 = vpack.c.b16 %v260, %v259
  %277 = vmatprep.subr.bf16.mxu0 0
  %278 = vmatpush1.bf16.msra.mxu0 %v268
  %279 = vmatprep.subr.bf16.mxu0 0
  %280 = vmatpush1.bf16.msra.mxu0 %v267
  %281 = vmatprep.subr.bf16.mxu0 0
  %282 = vmatpush1.bf16.msra.mxu0 %v266
  %283 = vmatprep.subr.bf16.mxu0 0
  %284 = vmatpush1.bf16.msra.mxu0 %v265
  %285 = vmatprep.subr.bf16.mxu0 0
  %286 = vmatpush1.bf16.msra.mxu0 %v264
  %287 = vmatprep.subr.bf16.mxu0 0
  %288 = vmatpush1.bf16.msra.mxu0 %v263
  %289 = vmatprep.subr.bf16.mxu0 0
  %290 = vmatpush1.bf16.msra.mxu0 %v262
  %291 = vmatprep.subr.bf16.mxu0 0
  %292 = vmatpush1.bf16.msra.mxu0 %v261
  %293 = vmatprep.subr.bf16.mxu0 0
  %294 = vmatpush2.bf16.msra.mxu0 0
  %295 = vmatprep.subr.bf16.mxu0 0
  %296 = vmatpush2.bf16.msra.mxu0 0
  %297 = vmatprep.subr.bf16.mxu0 0
  %298 = vmatpush2.bf16.msra.mxu0 0
  %299 = vmatprep.subr.bf16.mxu0 0
  %300 = vmatpush2.bf16.msra.mxu0 0
  %301 = vmatprep.subr.bf16.mxu0 0
  %302 = vmatpush2.bf16.msra.mxu0 0
  %303 = vmatprep.subr.bf16.mxu0 0
  %304 = vmatpush2.bf16.msra.mxu0 0
  %305 = vmatprep.subr.bf16.mxu0 0
  %306 = vmatpush2.bf16.msra.mxu0 0
  %307 = vmatprep.subr.bf16.mxu0 0
  %308 = vmatpush2.bf16.msra.mxu0 0
  %309 = vmatprep.mubr.bf16.mxu0 0
  %310 = vmatmul.mubr.bf16.gmra.mxu0 %v205
  %v311 = vpop.f32.mrf.mxu0
  %v312 = vadd.f32 %v227, %v311
  %v313 = vpop.f32.mrf.mxu0
  %v314 = vpop.f32.mrf.mxu0
  %v315 = vpop.f32.mrf.mxu0
  %316 = vdwg.mxu0
  %vm317 = vcmask 31744
  %318 = vst.msk [vmem:[%s7] sm:$0xff] %vm317, %v312
  // Predicated region
  $region30: #{network_forward.1} parent=0 // pred_check
    _
  $region31: #{network_forward.1} parent=0 // pred_check_branch
    %320 = sbr.rel (0) target = $region33
  $region32: #{network_forward.1} parent=0 // pred_region
    _
  $region33: #{network_forward.1} parent=0 // pred_fallthru
    _
  // Predicated region
  $region34: #{network_forward.1} parent=0 // pred_check
    _
  $region35: #{network_forward.1} parent=0 // pred_check_branch
    %322 = sbr.rel (0) target = $region37
  $region36: #{network_forward.1} parent=0 // pred_region
    _
  $region37: #{network_forward.1} parent=0 // pred_fallthru
    _

</llo_original>
